<compile_context>
chip_gen: v7x
topology: tpu7x:2x2x1
jax: 0.10.0
libtpu: 0.0.40
codegen_flags: <defaults>
</compile_context>

<pallas_src>
import jax
import jax.numpy as jnp
from jax import lax
from jax.experimental import pallas as pl
from jax.experimental.pallas import tpu as pltpu


def _make_fc_block_kernel(*, use_bn: bool, use_relu: bool, use_bias: bool, eps: float):
    def kernel(*refs):
        idx = 0
        x_ref = refs[idx]; idx += 1          # (tb, tk)
        w_ref = refs[idx]; idx += 1          # (tn, tk)  -- PyTorch layout tile
        b_ref = None
        gamma_ref = beta_ref = None
        if use_bias:
            b_ref = refs[idx]; idx += 1      # (1, tn)
        if use_bn:
            gamma_ref = refs[idx]            # (1, tn)
            beta_ref = refs[idx + 1]         # (1, tn)
            idx += 2
        o_ref = refs[idx]                    # (tb, tn)
        acc_ref = refs[idx + 1]              # (tb, tn) f32 scratch

        k = pl.program_id(2)
        nk = pl.num_programs(2)

        @pl.when(k == 0)
        def _():
            acc_ref[...] = jnp.zeros_like(acc_ref)

        # (tb, tk) x (tn, tk) contracting last dims -> (tb, tn); the MXU consumes the
        # weight in its native (out, in) orientation, no transpose needed anywhere.
        acc_ref[...] += lax.dot_general(
            x_ref[...], w_ref[...],
            dimension_numbers=(((1,), (1,)), ((), ())),
            preferred_element_type=jnp.float32)

        @pl.when(k == nk - 1)
        def _():
            y = acc_ref[...]
            if use_bias:
                y = y + b_ref[...]
            if use_bn:
                # BatchNorm1d training mode: biased batch statistics over the batch
                # axis (whole batch resides in this tile when BN is enabled).
                inv_n = 1.0 / y.shape[0]
                s1 = jnp.sum(y, axis=0, keepdims=True)
                s2 = jnp.sum(y * y, axis=0, keepdims=True)
                mean = s1 * inv_n
                var = s2 * inv_n - mean * mean
                y = (y - mean) * lax.rsqrt(var + eps)
                y = y * gamma_ref[...] + beta_ref[...]
            if use_relu:
                y = jnp.maximum(y, 0.0)
            o_ref[...] = y.astype(o_ref.dtype)

    return kernel


def fc_block(x, weight, bias, gamma=None, beta=None, *,
             activation=True, normalization='None',
             tile_b=256, tile_n=256, tile_k=512, eps=1e-5):
    """Fused Linear (+BatchNorm1d training-mode) (+ReLU).

    x:      (N, in_features)               float32
    weight: (out_features, in_features)    PyTorch nn.Linear layout (NOT transposed)
    bias:   (out_features,)
    gamma, beta: (out_features,)           only used when normalization == 'batch_norm'
    """
    N, K = x.shape
    out_features, K_w = weight.shape
    assert K_w == K, "weight must be (out_features, in_features)"

    use_bn = (normalization == 'batch_norm')
    use_relu = bool(activation)
    use_bias = not use_bn  # bias is exactly cancelled by BN's mean subtraction

    tn = min(tile_n, out_features)
    assert out_features % tn == 0, "out_features must be divisible by tile_n"
    tk = min(tile_k, K)
    assert K % tk == 0, "in_features must be divisible by tile_k"
    # BN statistics need the whole batch resident per output tile; otherwise tile it
    # too so both TensorCores (v7x) get independent work and output buffers shrink.
    tb = N if (use_bn or N <= tile_b) else tile_b
    assert N % tb == 0, "batch must be divisible by tile_b when batch-tiling"

    grid = (N // tb, out_features // tn, K // tk)

    args = [x, weight]
    in_specs = [
        pl.BlockSpec((tb, tk), lambda i, j, k: (i, k)),   # activations
        pl.BlockSpec((tn, tk), lambda i, j, k: (j, k)),   # weight tile (out, in)
    ]
    if use_bias:
        args.append(jnp.asarray(bias).reshape(1, out_features))
        in_specs.append(pl.BlockSpec((1, tn), lambda i, j, k: (0, j)))
    if use_bn:
        args.append(jnp.asarray(gamma).reshape(1, out_features))
        args.append(jnp.asarray(beta).reshape(1, out_features))
        in_specs.append(pl.BlockSpec((1, tn), lambda i, j, k: (0, j)))
        in_specs.append(pl.BlockSpec((1, tn), lambda i, j, k: (0, j)))

    # VMEM budget for this tile plan (double-buffered inputs/outputs + f32 acc),
    # with 2x headroom, capped at 64 MiB so the plan also fits v7x.
    elt = jnp.dtype(x.dtype).itemsize
    vmem_bytes = (2 * tb * tk * elt          # x tiles (double-buffered)
                  + 2 * tn * tk * elt        # weight tiles
                  + 2 * tb * tn * elt        # output tiles
                  + tb * tn * 4              # f32 accumulator
                  + 2 * 3 * tn * elt)        # bias/gamma/beta rows
    vmem_limit = int(min(max(2 * vmem_bytes, 16 << 20), 64 << 20))

    kernel = _make_fc_block_kernel(use_bn=use_bn, use_relu=use_relu,
                                   use_bias=use_bias, eps=eps)

    return pl.pallas_call(
        kernel,
        out_shape=jax.ShapeDtypeStruct((N, out_features), x.dtype),
        grid_spec=pltpu.PrefetchScalarGridSpec(
            num_scalar_prefetch=0,
            grid=grid,
            in_specs=in_specs,
            out_specs=pl.BlockSpec((tb, tn), lambda i, j, k: (i, j)),
            scratch_shapes=[pltpu.VMEM((tb, tn), jnp.float32)],
        ),
        compiler_params=pltpu.CompilerParams(
            dimension_semantics=("parallel", "parallel", "arbitrary"),
            vmem_limit_bytes=vmem_limit),
    )(*args)


def _reference(x, weight, bias, gamma, beta, *, activation, normalization, eps=1e-5):
    y = x @ weight.T + bias
    if normalization == 'batch_norm':
        mean = jnp.mean(y, axis=0, keepdims=True)
        var = jnp.mean((y - mean) ** 2, axis=0, keepdims=True)  # biased, training mode
        y = (y - mean) / jnp.sqrt(var + eps)
        y = y * gamma + beta
    if activation:
        y = jnp.maximum(y, 0.0)
    return y


if __name__ == "__main__":
    key = jax.random.PRNGKey(0)
    N, in_features, out_features = 16, 32, 256

    kx, kw, kb = jax.random.split(key, 3)
    x = jax.random.normal(kx, (N, in_features), dtype=jnp.float32)

    # PyTorch-like uniform(-1/sqrt(in), 1/sqrt(in)) init
    bound = 1.0 / (in_features ** 0.5)
    weight = jax.random.uniform(kw, (out_features, in_features),
                                minval=-bound, maxval=bound, dtype=jnp.float32)
    bias = jax.random.uniform(kb, (out_features,),
                              minval=-bound, maxval=bound, dtype=jnp.float32)
    gamma = jnp.ones((out_features,), dtype=jnp.float32)   # BatchNorm1d weight
    beta = jnp.zeros((out_features,), dtype=jnp.float32)   # BatchNorm1d bias

    # Full path: linear + batch_norm + relu
    out = jax.block_until_ready(
        fc_block(x, weight, bias, gamma, beta,
                 activation=True, normalization='batch_norm'))
    ref = _reference(x, weight, bias, gamma, beta,
                     activation=True, normalization='batch_norm')
    assert jnp.allclose(out, ref, atol=1e-4, rtol=1e-4), "batch_norm path mismatch"

    # No-norm / relu-only path (normalization='None')
    out2 = jax.block_until_ready(
        fc_block(x, weight, bias, gamma, beta,
                 activation=True, normalization='None'))
    ref2 = _reference(x, weight, bias, gamma, beta,
                      activation=True, normalization='None')
    assert jnp.allclose(out2, ref2, atol=1e-4, rtol=1e-4), "plain path mismatch"

    # TODO(synk): BatchNorm1d running-stat (eval-mode) path and running-mean/var
    # updates are not modeled; this matches the training-mode forward only.
    print("KERNEL_OK")
</pallas_src>

<mosaic_0001>
module attributes {stable_mosaic.version = 11 : i64} {
  func.func @kernel(%arg0: i32, %arg1: i32, %arg2: i32, %arg3: memref<16x32xf32, #tpu.memory_space<vmem>>, %arg4: memref<256x32xf32, #tpu.memory_space<vmem>>, %arg5: memref<1x256xf32, #tpu.memory_space<vmem>>, %arg6: memref<1x256xf32, #tpu.memory_space<vmem>>, %arg7: memref<16x256xf32, #tpu.memory_space<vmem>>, %arg8: memref<16x256xf32, #tpu.memory_space<vmem>>) attributes {dimension_semantics = [#tpu.dimension_semantics<parallel>, #tpu.dimension_semantics<parallel>, #tpu.dimension_semantics<arbitrary>], iteration_bounds = array<i64: 1, 1, 1>, scalar_prefetch = 0 : i64, scratch_operands = 1 : i64, tpu.core_type = #tpu.core_type<tc>, window_params = [{transform_indices = @transform_0, window_bounds = array<i64: 16, 32>}, {transform_indices = @transform_1, window_bounds = array<i64: 256, 32>}, {transform_indices = @transform_2, window_bounds = array<i64: 1, 256>}, {transform_indices = @transform_3, window_bounds = array<i64: 1, 256>}, {transform_indices = @transform_4, window_bounds = array<i64: 16, 256>}]} {
    %c0_i32 = arith.constant 0 : i32
    %0 = arith.cmpi eq, %arg2, %c0_i32 : i32
    %1 = arith.extui %0 : i1 to i32
    %c0_i32_0 = arith.constant 0 : i32
    %2 = arith.cmpi ne, %1, %c0_i32_0 : i32
    scf.if %2 {
      %cst_10 = arith.constant 0.000000e+00 : f32
      %12 = vector.broadcast %cst_10 : f32 to vector<16x256xf32>
      %c0_11 = arith.constant 0 : index
      %c0_12 = arith.constant 0 : index
      %13 = vector.load %arg8[%c0_11, %c0_12] : memref<16x256xf32, #tpu.memory_space<vmem>>, vector<16x256xf32>
      tpu.vector_store %arg8[%c0_11, %c0_12], %12 {strides = array<i32>} : memref<16x256xf32, #tpu.memory_space<vmem>>, vector<16x256xf32>,
    } else {
    }
    %c0 = arith.constant 0 : index
    %c0_1 = arith.constant 0 : index
    %3 = vector.load %arg8[%c0, %c0_1] : memref<16x256xf32, #tpu.memory_space<vmem>>, vector<16x256xf32>
    %c0_2 = arith.constant 0 : index
    %c0_3 = arith.constant 0 : index
    %4 = vector.load %arg3[%c0_2, %c0_3] : memref<16x32xf32, #tpu.memory_space<vmem>>, vector<16x32xf32>
    %c0_4 = arith.constant 0 : index
    %c0_5 = arith.constant 0 : index
    %5 = vector.load %arg4[%c0_4, %c0_5] : memref<256x32xf32, #tpu.memory_space<vmem>>, vector<256x32xf32>
    %cst = arith.constant dense<0.000000e+00> : vector<16x256xf32>
    %6 = tpu.matmul %4, %5, %cst {dimension_numbers = #tpu.dot_dimension_numbers<[1], [1], [0], [0], [0, 0, 1, 0], [], []>} : vector<16x32xf32>, vector<256x32xf32>, vector<16x256xf32> -> vector<16x256xf32>
    %7 = arith.addf %3, %6 : vector<16x256xf32>
    %c0_6 = arith.constant 0 : index
    %c0_7 = arith.constant 0 : index
    %8 = vector.load %arg8[%c0_6, %c0_7] : memref<16x256xf32, #tpu.memory_space<vmem>>, vector<16x256xf32>
    tpu.vector_store %arg8[%c0_6, %c0_7], %7 {strides = array<i32>} : memref<16x256xf32, #tpu.memory_space<vmem>>, vector<16x256xf32>,
    %c0_i32_8 = arith.constant 0 : i32
    %9 = arith.cmpi eq, %arg2, %c0_i32_8 : i32
    %10 = arith.extui %9 : i1 to i32
    %c0_i32_9 = arith.constant 0 : i32
    %11 = arith.cmpi ne, %10, %c0_i32_9 : i32
    scf.if %11 {
      %c0_10 = arith.constant 0 : index
      %c0_11 = arith.constant 0 : index
      %12 = vector.load %arg8[%c0_10, %c0_11] : memref<16x256xf32, #tpu.memory_space<vmem>>, vector<16x256xf32>
      %cst_12 = arith.constant dense<0.000000e+00> : vector<256xf32>
      %13 = vector.multi_reduction <add>, %12, %cst_12 [0] : vector<16x256xf32> to vector<256xf32>
      %14 = vector.shape_cast %13 : vector<256xf32> to vector<1x256xf32>
      %15 = arith.mulf %12, %12 : vector<16x256xf32>
      %cst_13 = arith.constant dense<0.000000e+00> : vector<256xf32>
      %16 = vector.multi_reduction <add>, %15, %cst_13 [0] : vector<16x256xf32> to vector<256xf32>
      %17 = vector.shape_cast %16 : vector<256xf32> to vector<1x256xf32>
      %cst_14 = arith.constant 6.250000e-02 : f32
      %18 = vector.broadcast %cst_14 : f32 to vector<1x256xf32>
      %19 = arith.mulf %14, %18 : vector<1x256xf32>
      %cst_15 = arith.constant 6.250000e-02 : f32
      %20 = vector.broadcast %cst_15 : f32 to vector<1x256xf32>
      %21 = arith.mulf %17, %20 : vector<1x256xf32>
      %22 = arith.mulf %19, %19 : vector<1x256xf32>
      %23 = arith.subf %21, %22 : vector<1x256xf32>
      %24 = vector.broadcast %19 : vector<1x256xf32> to vector<16x256xf32>
      %25 = arith.subf %12, %24 : vector<16x256xf32>
      %cst_16 = arith.constant 9.99999974E-6 : f32
      %26 = vector.broadcast %cst_16 : f32 to vector<1x256xf32>
      %27 = arith.addf %23, %26 : vector<1x256xf32>
      %28 = math.rsqrt %27 : vector<1x256xf32>
      %29 = vector.broadcast %28 : vector<1x256xf32> to vector<16x256xf32>
      %30 = arith.mulf %25, %29 : vector<16x256xf32>
      %c0_17 = arith.constant 0 : index
      %c0_18 = arith.constant 0 : index
      %31 = vector.load %arg5[%c0_17, %c0_18] : memref<1x256xf32, #tpu.memory_space<vmem>>, vector<1x256xf32>
      %32 = vector.broadcast %31 : vector<1x256xf32> to vector<16x256xf32>
      %33 = arith.mulf %30, %32 : vector<16x256xf32>
      %c0_19 = arith.constant 0 : index
      %c0_20 = arith.constant 0 : index
      %34 = vector.load %arg6[%c0_19, %c0_20] : memref<1x256xf32, #tpu.memory_space<vmem>>, vector<1x256xf32>
      %35 = vector.broadcast %34 : vector<1x256xf32> to vector<16x256xf32>
      %36 = arith.addf %33, %35 : vector<16x256xf32>
      %cst_21 = arith.constant 0.000000e+00 : f32
      %37 = vector.broadcast %cst_21 : f32 to vector<16x256xf32>
      %38 = arith.maximumf %36, %37 : vector<16x256xf32>
      %c0_22 = arith.constant 0 : index
      %c0_23 = arith.constant 0 : index
      %39 = vector.load %arg7[%c0_22, %c0_23] : memref<16x256xf32, #tpu.memory_space<vmem>>, vector<16x256xf32>
      tpu.vector_store %arg7[%c0_22, %c0_23], %38 {strides = array<i32>} : memref<16x256xf32, #tpu.memory_space<vmem>>, vector<16x256xf32>,
    } else {
    }
    return
  }
  func.func @transform_0(%arg0: i32, %arg1: i32, %arg2: i32) -> (i32, i32) {
    %c0_i32 = arith.constant 0 : i32
    return %arg0, %arg2 : i32, i32
  }
  func.func @transform_1(%arg0: i32, %arg1: i32, %arg2: i32) -> (i32, i32) {
    %c0_i32 = arith.constant 0 : i32
    return %arg1, %arg2 : i32, i32
  }
  func.func @transform_2(%arg0: i32, %arg1: i32, %arg2: i32) -> (i32, i32) {
    %c0_i32 = arith.constant 0 : i32
    %c0_i32_0 = arith.constant 0 : i32
    return %c0_i32, %arg1 : i32, i32
  }
  func.func @transform_3(%arg0: i32, %arg1: i32, %arg2: i32) -> (i32, i32) {
    %c0_i32 = arith.constant 0 : i32
    %c0_i32_0 = arith.constant 0 : i32
    return %c0_i32, %arg1 : i32, i32
  }
  func.func @transform_4(%arg0: i32, %arg1: i32, %arg2: i32) -> (i32, i32) {
    %c0_i32 = arith.constant 0 : i32
    return %arg0, %arg1 : i32, i32
  }
}

</mosaic_0001>

<llo_original>
// kernel: tpu_custom_call.1
$region0: #{tpu_custom_call.1}
  #allocation0 [shape = 'u32[]', space=smem, size = 0x4, offset = 0x4, fixed_abs, tag = 'smem constant byte address 0x4 - core index']
  #allocation1 [shape = 'u32[144,128]{1,0:T(1,128)}', space=vmem, size = 0x12000, scoped, tag = 'internal scratch']
  #allocation2 [shape = 'f32[16,256]{1,0:T(8,128)}', space=vmem, size = 0x4000, scoped, tag = 'scratch operand']
  %s0 = inlined_call_operand.vmem [shape: f32[16,32], index: 0, kind: input, shape index: {}]
  %s1 = inlined_call_operand.vmem [shape: f32[256,32], index: 1, kind: input, shape index: {}]
  %s2 = inlined_call_operand.vmem [shape: f32[1,256], index: 2, kind: input, shape index: {}]
  %s3 = inlined_call_operand.vmem [shape: f32[1,256], index: 3, kind: input, shape index: {}]
  %s4 = inlined_call_operand.hbm [shape: f32[16,256], index: 4, kind: output, shape index: {}]
  %s5 = sld [smem:[#allocation0]]
  $region34: #{tpu_custom_call.1} parent=0
    _
  %s7 = ssub.s32 1, %s5
  %s8 = scalar_select 0, %s7, %s5
  $region1: #{tpu_custom_call.1} parent=0
    #allocation3 [shape = 'u8[16384]{0}', space=vmem, size = 0x4000, scoped, tag = 'output window, operand 0, single buffered']
    #allocation4 [shape = 's32[1]{0}', space=sflag, size = 0x4, scoped, tag = 'scoped memory for tpu_custom_call.1']
    %9 = vsyncpa [#allocation4], 0
    // Predicated region
    $region2: #{tpu_custom_call.1} parent=1 // pred_check
      _
    $region3: #{tpu_custom_call.1} parent=1 // pred_check_branch
      %11 = sbr.rel (0) target = $region5
    $region4: #{tpu_custom_call.1} parent=1 // pred_region
      _
    $region5: #{tpu_custom_call.1} parent=1 // pred_fallthru
      _
    // Predicated region
    $region6: #{tpu_custom_call.1} parent=1 // pred_check
      _
    $region7: #{tpu_custom_call.1} parent=1 // pred_check_branch
      %13 = sbr.rel (0) target = $region9
    $region8: #{tpu_custom_call.1} parent=1 // pred_region
      _
    $region9: #{tpu_custom_call.1} parent=1 // pred_fallthru
      _
    // Predicated region
    $region10: #{tpu_custom_call.1} parent=1 // pred_check
      _
    $region11: #{tpu_custom_call.1} parent=1 // pred_check_branch
      %15 = sbr.rel (0) target = $region13
    $region12: #{tpu_custom_call.1} parent=1 // pred_region
      _
    $region13: #{tpu_custom_call.1} parent=1 // pred_fallthru
      _
    // Predicated region
    $region14: #{tpu_custom_call.1} parent=1 // pred_check
      _
    $region15: #{tpu_custom_call.1} parent=1 // pred_check_branch
      %17 = sbr.rel (0) target = $region17
    $region16: #{tpu_custom_call.1} parent=1 // pred_region
      _
    $region17: #{tpu_custom_call.1} parent=1 // pred_fallthru
      _
    %p18 = scmp.eq.s32.totalorder 0, 0
    // Predicated region
    $region18: #{tpu_custom_call.1} parent=1 // pred_check
      %p19 = pneg %p18
    $region19: #{tpu_custom_call.1} parent=1 // pred_check_branch
      %21 = sbr.rel (%p19) target = $region21
    $region20: #{tpu_custom_call.1} parent=1 // pred_region
      %22 = vst [vmem:[#allocation2] sm:$0xff] 0.0
      %23 = vst [vmem:[#allocation2 + $0x8] sm:$0xff] 0.0
      %24 = vst [vmem:[#allocation2 + $0x10] sm:$0xff] 0.0
      %25 = vst [vmem:[#allocation2 + $0x18] sm:$0xff] 0.0
    $region21: #{tpu_custom_call.1} parent=1 // pred_fallthru
      _
    %v26 = vld [vmem:[#allocation2] sm:$0xff]
    %v27 = vld [vmem:[#allocation2 + $0x8] sm:$0xff]
    %v28 = vld [vmem:[#allocation2 + $0x10] sm:$0xff]
    %v29 = vld [vmem:[#allocation2 + $0x18] sm:$0xff]
    %v30 = vld [vmem:[%s0] sm:$0xff]
    %v31 = vld [vmem:[%s0 + $0x8] sm:$0xff]
    %v32 = vld [vmem:[%s1] sm:$0xff]
    %v33 = vld [vmem:[%s1 + $0x8] sm:$0xff]
    %v34 = vld [vmem:[%s1 + $0x10] sm:$0xff]
    %v35 = vld [vmem:[%s1 + $0x18] sm:$0xff]
    %v36 = vld [vmem:[%s1 + $0x20] sm:$0xff]
    %v37 = vld [vmem:[%s1 + $0x28] sm:$0xff]
    %v38 = vld [vmem:[%s1 + $0x30] sm:$0xff]
    %v39 = vld [vmem:[%s1 + $0x38] sm:$0xff]
    %v40 = vld [vmem:[%s1 + $0x40] sm:$0xff]
    %v41 = vld [vmem:[%s1 + $0x48] sm:$0xff]
    %v42 = vld [vmem:[%s1 + $0x50] sm:$0xff]
    %v43 = vld [vmem:[%s1 + $0x58] sm:$0xff]
    %v44 = vld [vmem:[%s1 + $0x60] sm:$0xff]
    %v45 = vld [vmem:[%s1 + $0x68] sm:$0xff]
    %v46 = vld [vmem:[%s1 + $0x70] sm:$0xff]
    %v47 = vld [vmem:[%s1 + $0x78] sm:$0xff]
    %v48 = vld [vmem:[%s1 + $0x80] sm:$0xff]
    %v49 = vld [vmem:[%s1 + $0x88] sm:$0xff]
    %v50 = vld [vmem:[%s1 + $0x90] sm:$0xff]
    %v51 = vld [vmem:[%s1 + $0x98] sm:$0xff]
    %v52 = vld [vmem:[%s1 + $0xa0] sm:$0xff]
    %v53 = vld [vmem:[%s1 + $0xa8] sm:$0xff]
    %v54 = vld [vmem:[%s1 + $0xb0] sm:$0xff]
    %v55 = vld [vmem:[%s1 + $0xb8] sm:$0xff]
    %v56 = vld [vmem:[%s1 + $0xc0] sm:$0xff]
    %v57 = vld [vmem:[%s1 + $0xc8] sm:$0xff]
    %v58 = vld [vmem:[%s1 + $0xd0] sm:$0xff]
    %v59 = vld [vmem:[%s1 + $0xd8] sm:$0xff]
    %v60 = vld [vmem:[%s1 + $0xe0] sm:$0xff]
    %v61 = vld [vmem:[%s1 + $0xe8] sm:$0xff]
    %v62 = vld [vmem:[%s1 + $0xf0] sm:$0xff]
    %v63 = vld [vmem:[%s1 + $0xf8] sm:$0xff]
    %vm64 = vcmask 261120
    %v66 = vsel %vm64, %v30, 0
    %v69 = vsel %vm64, %v31, 0
    %v72 = vsel %vm64, %v32, 0
    %v75 = vsel %vm64, %v33, 0
    %v78 = vsel %vm64, %v34, 0
    %v81 = vsel %vm64, %v35, 0
    %v84 = vsel %vm64, %v36, 0
    %v87 = vsel %vm64, %v37, 0
    %v90 = vsel %vm64, %v38, 0
    %v93 = vsel %vm64, %v39, 0
    %v96 = vsel %vm64, %v40, 0
    %v99 = vsel %vm64, %v41, 0
    %v102 = vsel %vm64, %v42, 0
    %v105 = vsel %vm64, %v43, 0
    %v108 = vsel %vm64, %v44, 0
    %v111 = vsel %vm64, %v45, 0
    %v114 = vsel %vm64, %v46, 0
    %v117 = vsel %vm64, %v47, 0
    %v120 = vsel %vm64, %v48, 0
    %v123 = vsel %vm64, %v49, 0
    %v126 = vsel %vm64, %v50, 0
    %v129 = vsel %vm64, %v51, 0
    %v132 = vsel %vm64, %v52, 0
    %v135 = vsel %vm64, %v53, 0
    %v138 = vsel %vm64, %v54, 0
    %v141 = vsel %vm64, %v55, 0
    %v144 = vsel %vm64, %v56, 0
    %v147 = vsel %vm64, %v57, 0
    %v150 = vsel %vm64, %v58, 0
    %v153 = vsel %vm64, %v59, 0
    %v156 = vsel %vm64, %v60, 0
    %v159 = vsel %vm64, %v61, 0
    %v162 = vsel %vm64, %v62, 0
    %v165 = vsel %vm64, %v63, 0
    %167 = vmatprep.subr.mxu0 0.0
    %168 = vmatpush1.xpose.msra.mxu0 %v72
    %169 = vmatprep.subr.mxu0 0.0
    %170 = vmatpush1.xpose.msra.mxu0 %v75
    %171 = vmatprep.subr.mxu0 0.0
    %172 = vmatpush1.xpose.msra.mxu0 %v78
    %173 = vmatprep.subr.mxu0 0.0
    %174 = vmatpush1.xpose.msra.mxu0 %v81
    %175 = vmatprep.subr.mxu0 0.0
    %176 = vmatpush1.xpose.msra.mxu0 %v84
    %177 = vmatprep.subr.mxu0 0.0
    %178 = vmatpush1.xpose.msra.mxu0 %v87
    %179 = vmatprep.subr.mxu0 0.0
    %180 = vmatpush1.xpose.msra.mxu0 %v90
    %181 = vmatprep.subr.mxu0 0.0
    %182 = vmatpush1.xpose.msra.mxu0 %v93
    %183 = vmatprep.subr.mxu0 0.0
    %184 = vmatpush1.xpose.msra.mxu0 %v96
    %185 = vmatprep.subr.mxu0 0.0
    %186 = vmatpush1.xpose.msra.mxu0 %v99
    %187 = vmatprep.subr.mxu0 0.0
    %188 = vmatpush1.xpose.msra.mxu0 %v102
    %189 = vmatprep.subr.mxu0 0.0
    %190 = vmatpush1.xpose.msra.mxu0 %v105
    %191 = vmatprep.subr.mxu0 0.0
    %192 = vmatpush1.xpose.msra.mxu0 %v108
    %193 = vmatprep.subr.mxu0 0.0
    %194 = vmatpush1.xpose.msra.mxu0 %v111
    %195 = vmatprep.subr.mxu0 0.0
    %196 = vmatpush1.xpose.msra.mxu0 %v114
    %197 = vmatprep.subr.mxu0 0.0
    %198 = vmatpush1.xpose.msra.mxu0 %v117
    %199 = vmatprep.subr.mxu0 0.0
    %200 = vmatpush1.xpose.msra.mxu0 %v120
    %201 = vmatprep.subr.mxu0 0.0
    %202 = vmatpush1.xpose.msra.mxu0 %v123
    %203 = vmatprep.subr.mxu0 0.0
    %204 = vmatpush1.xpose.msra.mxu0 %v126
    %205 = vmatprep.subr.mxu0 0.0
    %206 = vmatpush1.xpose.msra.mxu0 %v129
    %207 = vmatprep.subr.mxu0 0.0
    %208 = vmatpush1.xpose.msra.mxu0 %v132
    %209 = vmatprep.subr.mxu0 0.0
    %210 = vmatpush1.xpose.msra.mxu0 %v135
    %211 = vmatprep.subr.mxu0 0.0
    %212 = vmatpush1.xpose.msra.mxu0 %v138
    %213 = vmatprep.subr.mxu0 0.0
    %214 = vmatpush1.xpose.msra.mxu0 %v141
    %215 = vmatprep.subr.mxu0 0.0
    %216 = vmatpush1.xpose.msra.mxu0 %v144
    %217 = vmatprep.subr.mxu0 0.0
    %218 = vmatpush1.xpose.msra.mxu0 %v147
    %219 = vmatprep.subr.mxu0 0.0
    %220 = vmatpush1.xpose.msra.mxu0 %v150
    %221 = vmatprep.subr.mxu0 0.0
    %222 = vmatpush1.xpose.msra.mxu0 %v153
    %223 = vmatprep.subr.mxu0 0.0
    %224 = vmatpush1.xpose.msra.mxu0 %v156
    %225 = vmatprep.subr.mxu0 0.0
    %226 = vmatpush1.xpose.msra.mxu0 %v159
    %227 = vmatprep.subr.mxu0 0.0
    %228 = vmatpush1.xpose.msra.mxu0 %v162
    %229 = vmatprep.subr.mxu0 0.0
    %230 = vmatpush1.xpose.msra.mxu0 %v165
    %231 = vmatprep.mubr.f32.mxu0 0.0
    %232 = vmatmul.mubr.f32.gmra.mrb[0].mxu0 %v66
    %v233 = vpop.f32.mrb[0].mxu0
    %v234 = vadd.f32 0.0, %v233
    %v235 = vpop.f32.mrb[0].mxu0
    %v236 = vadd.f32 0.0, %v235
    %237 = vmatprep.mubr.f32.mxu0 0.0
    %238 = vmatmul.mubr.f32.gmra.mrb[0].mxu0 %v69
    %v239 = vpop.f32.mrb[0].mxu0
    %v240 = vadd.f32 0.0, %v239
    %v241 = vpop.f32.mrb[0].mxu0
    %v242 = vadd.f32 0.0, %v241
    %243 = vdwg.mxu0
    %v244 = vadd.f32 %v26, %v234
    %v245 = vadd.f32 %v27, %v236
    %v246 = vadd.f32 %v28, %v240
    %v247 = vadd.f32 %v29, %v242
    %248 = vst [vmem:[#allocation2] sm:$0xff] %v244
    %249 = vst [vmem:[#allocation2 + $0x8] sm:$0xff] %v245
    %250 = vst [vmem:[#allocation2 + $0x10] sm:$0xff] %v246
    %251 = vst [vmem:[#allocation2 + $0x18] sm:$0xff] %v247
    // Predicated region
    $region22: #{tpu_custom_call.1} parent=1 // pred_check
      %p252 = pneg %p18
    $region23: #{tpu_custom_call.1} parent=1 // pred_check_branch
      %254 = sbr.rel (%p252) target = $region25
    $region24: #{tpu_custom_call.1} parent=1 // pred_region
      %v255 = vld [vmem:[#allocation2] sm:$0xff]
      %v256 = vld [vmem:[#allocation2 + $0x8] sm:$0xff]
      %v257 = vld [vmem:[#allocation2 + $0x10] sm:$0xff]
      %v258 = vld [vmem:[#allocation2 + $0x18] sm:$0xff]
      %v259 = vadd.f32 %v255, %v257
      %v260 = vrot.slane %v259, 4
      %v261 = vadd.f32 %v259, %v260
      %v262 = vrot.slane %v261, 2
      %v263 = vadd.f32 %v261, %v262
      %v264 = vrot.slane %v263, 1
      %v265 = vadd.f32 %v263, %v264
      %v266 = vadd.f32 %v256, %v258
      %v267 = vrot.slane %v266, 4
      %v268 = vadd.f32 %v266, %v267
      %v269 = vrot.slane %v268, 2
      %v270 = vadd.f32 %v268, %v269
      %v271 = vrot.slane %v270, 1
      %v272 = vadd.f32 %v270, %v271
      %v273 = vmul.f32 %v255, %v255
      %v274 = vmul.f32 %v256, %v256
      %v275 = vmul.f32 %v257, %v257
      %v276 = vmul.f32 %v258, %v258
      %v277 = vadd.f32 %v273, %v275
      %v278 = vrot.slane %v277, 4
      %v279 = vadd.f32 %v277, %v278
      %v280 = vrot.slane %v279, 2
      %v281 = vadd.f32 %v279, %v280
      %v282 = vrot.slane %v281, 1
      %v283 = vadd.f32 %v281, %v282
      %v284 = vadd.f32 %v274, %v276
      %v285 = vrot.slane %v284, 4
      %v286 = vadd.f32 %v284, %v285
      %v287 = vrot.slane %v286, 2
      %v288 = vadd.f32 %v286, %v287
      %v289 = vrot.slane %v288, 1
      %v290 = vadd.f32 %v288, %v289
      %v291 = vmul.f32 %v265, 0.0625
      %v292 = vmul.f32 %v272, 0.0625
      %v293 = vmul.f32 %v283, 0.0625
      %v294 = vmul.f32 %v290, 0.0625
      %v295 = vmul.f32 %v291, %v291
      %v296 = vmul.f32 %v292, %v292
      %v297 = vsub.f32 %v293, %v295
      %v298 = vsub.f32 %v294, %v296
      %v299 = vsub.f32 %v255, %v291
      %v300 = vsub.f32 %v256, %v292
      %v301 = vsub.f32 %v257, %v291
      %v302 = vsub.f32 %v258, %v292
      %v303 = vadd.f32 %v297, 1e-05
      %v304 = vadd.f32 %v298, 1e-05
      %v305 = vrsqrt.pop %v303
      %v306 = vrsqrt.pop %v304
      %v307 = vmul.f32 %v299, %v305
      %v308 = vmul.f32 %v300, %v306
      %v309 = vmul.f32 %v301, %v305
      %v310 = vmul.f32 %v302, %v306
      %v311 = vld [vmem:[%s2] sm:$0x3]
      %v313 = vlaneseq
      %v314 = vshrl.u32 %v313, 7
      %v315 = vsub.s32 0, %v314
      %v316 = vrot.slane %v311, %v315
      %v317 = vlaneseq
      %v318 = vshrl.u32 %v317, 7
      %v319 = vsub.s32 1, %v318
      %v320 = vrot.slane %v311, %v319
      %v323 = vmul.f32 %v307, %v316
      %v324 = vmul.f32 %v308, %v320
      %v325 = vmul.f32 %v309, %v316
      %v326 = vmul.f32 %v310, %v320
      %v327 = vld [vmem:[%s3] sm:$0x3]
      %v329 = vlaneseq
      %v330 = vshrl.u32 %v329, 7
      %v331 = vsub.s32 0, %v330
      %v332 = vrot.slane %v327, %v331
      %v333 = vlaneseq
      %v334 = vshrl.u32 %v333, 7
      %v335 = vsub.s32 1, %v334
      %v336 = vrot.slane %v327, %v335
      %v339 = vadd.f32 %v323, %v332
      %v340 = vadd.f32 %v324, %v336
      %v341 = vadd.f32 %v325, %v332
      %v342 = vadd.f32 %v326, %v336
      %v343 = vmax.f32 %v339, 0.0
      %v344 = vmax.f32 %v340, 0.0
      %v345 = vmax.f32 %v341, 0.0
      %v346 = vmax.f32 %v342, 0.0
      %347 = vst [vmem:[#allocation3] sm:$0xff] %v343
      %348 = vst [vmem:[#allocation3 + $0x8] sm:$0xff] %v344
      %349 = vst [vmem:[#allocation3 + $0x10] sm:$0xff] %v345
      %350 = vst [vmem:[#allocation3 + $0x18] sm:$0xff] %v346
    $region25: #{tpu_custom_call.1} parent=1 // pred_fallthru
      _
    // Predicated region
    $region26: #{tpu_custom_call.1} parent=1 // pred_check
      _
    $region27: #{tpu_custom_call.1} parent=1 // pred_check_branch
      %352 = sbr.rel (0) target = $region29
    $region28: #{tpu_custom_call.1} parent=1 // pred_region
      %s354 = ssub.s32 512, 512
      %355 = vsyncadd [#allocation4], %s354
      %s356 = sshll.u32 [#allocation3], 4
      %s357 = int_to_ptr.vmem [resolvable:$true] %s356
      %362 = dma.vmem_to_hbm [thread:$0]  %s357, 512, %s4, [#allocation4], 256, 256, 16
    $region29: #{tpu_custom_call.1} parent=1 // pred_fallthru
      _
    // Predicated region
    $region30: #{tpu_custom_call.1} parent=1 // pred_check
      _
    $region31: #{tpu_custom_call.1} parent=1 // pred_check_branch
      %364 = sbr.rel (0) target = $region33
    $region32: #{tpu_custom_call.1} parent=1 // pred_region
      %365 = dma.done [#allocation4], 512
    $region33: #{tpu_custom_call.1} parent=1 // pred_fallthru
      _
    %366 = vsyncpa [#allocation4], 1

</llo_original>
